<compile_context>
chip_gen: v6e
topology: v6e:2x2x1
jax: 0.10.0
libtpu: 0.0.40
codegen_flags: <defaults>
</compile_context>

<pallas_src>
import jax
import jax.numpy as jnp
from jax.experimental import pallas as pl
from jax.experimental.pallas import tpu as pltpu


_VMEM_LIMIT_BYTES = 48 * 1024 * 1024
_VMEM_BUDGET_BYTES = 40 * 1024 * 1024  # leave headroom under the scoped limit


# ----------------------------------------------------------------------------
# Tile-size helper: largest candidate that evenly divides the dim, else the
# full dim (a full-extent block always satisfies the (8, 128) rule).
# ----------------------------------------------------------------------------
def _pick_tile(full, candidates):
    for c in candidates:
        if full >= c and full % c == 0:
            return c
    return full


# ----------------------------------------------------------------------------
# Fused FFN kernel:  y = ( silu(x @ w1t) * (x @ w3t) ) @ w2t
#   grid = (M//tm, hidden//th); hidden (reduction of the 2nd GEMM) last.
#   x tile (tm, dim) is resident across the hidden axis; the (M, hidden)
#   intermediate lives only in registers/VMEM.
# ----------------------------------------------------------------------------
def ffn_fused_kernel(x_ref, w1_ref, w3_ref, w2_ref, o_ref, acc_ref):
    h = pl.program_id(1)

    @pl.when(h == 0)
    def _init():
        acc_ref[...] = jnp.zeros_like(acc_ref)

    x = x_ref[...]
    g = jnp.dot(x, w1_ref[...], preferred_element_type=jnp.float32)
    u = jnp.dot(x, w3_ref[...], preferred_element_type=jnp.float32)
    a = (g * jax.nn.sigmoid(g) * u).astype(x.dtype)
    acc_ref[...] += jnp.dot(a, w2_ref[...], preferred_element_type=jnp.float32)

    @pl.when(h == pl.num_programs(1) - 1)
    def _finalize():
        o_ref[...] = acc_ref[...].astype(o_ref.dtype)


def ffn_fused(x2, w1t, w3t, w2t, *, out_dtype):
    # x2: (M, dim), w1t/w3t: (dim, hidden), w2t: (hidden, dim) -> (M, dim)
    M, dim = x2.shape
    hidden = w1t.shape[1]
    assert w1t.shape == (dim, hidden)
    assert w3t.shape == (dim, hidden)
    assert w2t.shape == (hidden, dim)

    tm = _pick_tile(M, (512, 256, 128, 64, 32, 16, 8))
    th = _pick_tile(hidden, (512, 256, 128))
    grid = (M // tm, hidden // th)

    in_bytes = jnp.dtype(x2.dtype).itemsize
    out_bytes = jnp.dtype(out_dtype).itemsize
    cost = pl.CostEstimate(
        flops=6 * M * hidden * dim + 4 * M * hidden,
        transcendentals=M * hidden,
        bytes_accessed=(M * dim + 3 * dim * hidden) * in_bytes
        + M * dim * out_bytes,
    )

    return pl.pallas_call(
        ffn_fused_kernel,
        out_shape=jax.ShapeDtypeStruct((M, dim), out_dtype),
        grid_spec=pltpu.PrefetchScalarGridSpec(
            num_scalar_prefetch=0,
            grid=grid,
            in_specs=[
                pl.BlockSpec((tm, dim), lambda i, h: (i, 0)),   # x (resident over h)
                pl.BlockSpec((dim, th), lambda i, h: (0, h)),   # w1t
                pl.BlockSpec((dim, th), lambda i, h: (0, h)),   # w3t
                pl.BlockSpec((th, dim), lambda i, h: (h, 0)),   # w2t
            ],
            out_specs=pl.BlockSpec((tm, dim), lambda i, h: (i, 0)),
            scratch_shapes=[pltpu.VMEM((tm, dim), jnp.float32)],
        ),
        compiler_params=pltpu.CompilerParams(
            dimension_semantics=("parallel", "arbitrary"),
            vmem_limit_bytes=_VMEM_LIMIT_BYTES,
        ),
        cost_estimate=cost,
    )(x2, w1t, w3t, w2t)


def _ffn_fused_vmem_estimate(M, dim, hidden, in_bytes, out_bytes):
    tm = _pick_tile(M, (512, 256, 128, 64, 32, 16, 8))
    th = _pick_tile(hidden, (512, 256, 128))
    return (
        2 * tm * dim * in_bytes          # x, double-buffered
        + 2 * 2 * dim * th * in_bytes    # w1t + w3t, double-buffered
        + 2 * th * dim * in_bytes        # w2t, double-buffered
        + 2 * tm * dim * out_bytes       # output, double-buffered
        + tm * dim * 4                   # f32 accumulator scratch
    )


# ----------------------------------------------------------------------------
# Fallback path (only used if the fused tiling would overflow VMEM):
# Kernel A: fused  h = silu(x @ w1t) * (x @ w3t)
# ----------------------------------------------------------------------------
def swiglu_kernel(x_ref, w1_ref, w3_ref, o_ref, acc1_ref, acc3_ref):
    k = pl.program_id(2)

    @pl.when(k == 0)
    def _init():
        acc1_ref[...] = jnp.zeros_like(acc1_ref)
        acc3_ref[...] = jnp.zeros_like(acc3_ref)

    x = x_ref[...]
    acc1_ref[...] += jnp.dot(x, w1_ref[...], preferred_element_type=jnp.float32)
    acc3_ref[...] += jnp.dot(x, w3_ref[...], preferred_element_type=jnp.float32)

    @pl.when(k == pl.num_programs(2) - 1)
    def _finalize():
        h1 = acc1_ref[...]
        h3 = acc3_ref[...]
        o_ref[...] = (h1 * jax.nn.sigmoid(h1) * h3).astype(o_ref.dtype)


def swiglu_matmul(x, w1t, w3t, *, out_dtype=None):
    M, K = x.shape
    K2, N = w1t.shape
    assert K == K2 and w3t.shape == (K, N)
    out_dtype = out_dtype or x.dtype

    tm = _pick_tile(M, (256, 128, 64, 32, 16, 8))
    tk = _pick_tile(K, (512, 256, 128))
    tn = _pick_tile(N, (512, 256, 128))
    grid = (M // tm, N // tn, K // tk)

    in_bytes = jnp.dtype(x.dtype).itemsize
    out_bytes = jnp.dtype(out_dtype).itemsize
    cost = pl.CostEstimate(
        flops=4 * M * N * K + 4 * M * N,
        transcendentals=M * N,
        bytes_accessed=(M * K + 2 * K * N) * in_bytes + M * N * out_bytes,
    )

    return pl.pallas_call(
        swiglu_kernel,
        out_shape=jax.ShapeDtypeStruct((M, N), out_dtype),
        grid_spec=pltpu.PrefetchScalarGridSpec(
            num_scalar_prefetch=0,
            grid=grid,
            in_specs=[
                pl.BlockSpec((tm, tk), lambda i, j, k: (i, k)),
                pl.BlockSpec((tk, tn), lambda i, j, k: (k, j)),
                pl.BlockSpec((tk, tn), lambda i, j, k: (k, j)),
            ],
            out_specs=pl.BlockSpec((tm, tn), lambda i, j, k: (i, j)),
            scratch_shapes=[
                pltpu.VMEM((tm, tn), jnp.float32),
                pltpu.VMEM((tm, tn), jnp.float32),
            ],
        ),
        compiler_params=pltpu.CompilerParams(
            dimension_semantics=("parallel", "parallel", "arbitrary"),
            vmem_limit_bytes=_VMEM_LIMIT_BYTES,
        ),
        cost_estimate=cost,
    )(x, w1t, w3t)


# Kernel B: standard tiled matmul  y = a @ b
def matmul_kernel(a_ref, b_ref, o_ref, acc_ref):
    @pl.when(pl.program_id(2) == 0)
    def _init():
        acc_ref[...] = jnp.zeros_like(acc_ref)

    acc_ref[...] += jnp.dot(a_ref[...], b_ref[...],
                            preferred_element_type=jnp.float32)

    @pl.when(pl.program_id(2) == pl.num_programs(2) - 1)
    def _finalize():
        o_ref[...] = acc_ref[...].astype(o_ref.dtype)


def matmul(a, b, *, out_dtype=None):
    M, K = a.shape
    K2, N = b.shape
    assert K == K2
    out_dtype = out_dtype or a.dtype

    tm = _pick_tile(M, (256, 128, 64, 32, 16, 8))
    tk = _pick_tile(K, (512, 256, 128))
    tn = _pick_tile(N, (512, 256, 128))
    grid = (M // tm, N // tn, K // tk)

    in_bytes = jnp.dtype(a.dtype).itemsize
    out_bytes = jnp.dtype(out_dtype).itemsize
    cost = pl.CostEstimate(
        flops=2 * M * N * K,
        transcendentals=0,
        bytes_accessed=(M * K + K * N) * in_bytes + M * N * out_bytes,
    )

    return pl.pallas_call(
        matmul_kernel,
        out_shape=jax.ShapeDtypeStruct((M, N), out_dtype),
        grid_spec=pltpu.PrefetchScalarGridSpec(
            num_scalar_prefetch=0,
            grid=grid,
            in_specs=[
                pl.BlockSpec((tm, tk), lambda i, j, k: (i, k)),
                pl.BlockSpec((tk, tn), lambda i, j, k: (k, j)),
            ],
            out_specs=pl.BlockSpec((tm, tn), lambda i, j, k: (i, j)),
            scratch_shapes=[pltpu.VMEM((tm, tn), jnp.float32)],
        ),
        compiler_params=pltpu.CompilerParams(
            dimension_semantics=("parallel", "parallel", "arbitrary"),
            vmem_limit_bytes=_VMEM_LIMIT_BYTES,
        ),
        cost_estimate=cost,
    )(a, b)


# ----------------------------------------------------------------------------
# FeedForward forward pass (mirrors the PyTorch module)
#   w1: (hidden, dim)   w2: (dim, hidden)   w3: (hidden, dim)   (nn.Linear layout)
# ----------------------------------------------------------------------------
def feed_forward(x, w1, w2, w3, *, compute_dtype=jnp.bfloat16):
    B, S, dim = x.shape
    hidden = w1.shape[0]
    assert w1.shape == (hidden, dim)
    assert w3.shape == (hidden, dim)
    assert w2.shape == (dim, hidden)

    M = B * S
    # bf16 MXU feed (f32 accumulation inside the kernels); one-time weight
    # transpose to (K, N) for lane-dense MXU input.
    x2 = x.reshape(M, dim).astype(compute_dtype)
    w1t = jnp.transpose(w1).astype(compute_dtype)   # (dim, hidden)
    w3t = jnp.transpose(w3).astype(compute_dtype)   # (dim, hidden)
    w2t = jnp.transpose(w2).astype(compute_dtype)   # (hidden, dim)

    in_bytes = jnp.dtype(compute_dtype).itemsize
    out_bytes = jnp.dtype(x.dtype).itemsize
    if _ffn_fused_vmem_estimate(M, dim, hidden, in_bytes, out_bytes) <= _VMEM_BUDGET_BYTES:
        # Fully fused path: no HBM traffic for the (M, hidden) intermediate.
        y = ffn_fused(x2, w1t, w3t, w2t, out_dtype=x.dtype)
    else:
        # Two-kernel pipelined fallback for very large dim/hidden.
        h = swiglu_matmul(x2, w1t, w3t)              # (M, hidden), fused silu*gate
        y = matmul(h, w2t, out_dtype=x.dtype)        # (M, dim)

    # self.dropout: identity in inference/eval mode (p only applies in training).
    return y.reshape(B, S, dim)


# ----------------------------------------------------------------------------
# Pure-JAX reference (same math, same bf16 rounding points) for a sanity check
# ----------------------------------------------------------------------------
def feed_forward_reference(x, w1, w2, w3, *, compute_dtype=jnp.bfloat16):
    B, S, dim = x.shape
    f32 = jnp.float32
    hp = jax.lax.Precision.HIGHEST

    xc = x.astype(compute_dtype).astype(f32).reshape(B * S, dim)
    w1t = jnp.transpose(w1).astype(compute_dtype).astype(f32)
    w3t = jnp.transpose(w3).astype(compute_dtype).astype(f32)
    w2t = jnp.transpose(w2).astype(compute_dtype).astype(f32)

    h1 = jnp.dot(xc, w1t, precision=hp)
    h3 = jnp.dot(xc, w3t, precision=hp)
    h = (h1 * jax.nn.sigmoid(h1) * h3).astype(compute_dtype).astype(f32)
    y = jnp.dot(h, w2t, precision=hp)
    return y.reshape(B, S, dim).astype(x.dtype)


# ----------------------------------------------------------------------------
if __name__ == "__main__":
    # Small config consistent with the module: dim=128, multiple_of=64
    # -> hidden_dim = multiple_of * ceil((2*4*dim/3)/multiple_of) = 384
    batch, seq_len, dim = 2, 64, 128
    multiple_of = 64
    hidden_dim = 4 * dim
    hidden_dim = int(2 * hidden_dim / 3)
    hidden_dim = multiple_of * ((hidden_dim + multiple_of - 1) // multiple_of)

    key = jax.random.PRNGKey(0)
    kx, k1, k2, k3 = jax.random.split(key, 4)

    x = jax.random.normal(kx, (batch, seq_len, dim), dtype=jnp.float32)
    w1 = (dim ** -0.5) * jax.random.normal(k1, (hidden_dim, dim), dtype=jnp.float32)
    w2 = (hidden_dim ** -0.5) * jax.random.normal(k2, (dim, hidden_dim), dtype=jnp.float32)
    w3 = (dim ** -0.5) * jax.random.normal(k3, (hidden_dim, dim), dtype=jnp.float32)

    out = feed_forward(x, w1, w2, w3)
    out = jax.block_until_ready(out)

    ref = jax.block_until_ready(feed_forward_reference(x, w1, w2, w3))

    assert out.shape == (batch, seq_len, dim)
    max_err = float(jnp.max(jnp.abs(out - ref)))
    assert jnp.allclose(out, ref, atol=2e-2, rtol=2e-2), (
        f"mismatch vs reference, max abs err = {max_err}")

    print("KERNEL_OK")
</pallas_src>

<mosaic_0001>
module attributes {stable_mosaic.version = 11 : i64} {
  func.func @ffn_fused_kernel(%arg0: i32, %arg1: i32, %arg2: memref<128x128xbf16, #tpu.memory_space<vmem>>, %arg3: memref<128x128xbf16, #tpu.memory_space<vmem>>, %arg4: memref<128x128xbf16, #tpu.memory_space<vmem>>, %arg5: memref<128x128xbf16, #tpu.memory_space<vmem>>, %arg6: memref<128x128xf32, #tpu.memory_space<vmem>>, %arg7: memref<128x128xf32, #tpu.memory_space<vmem>>) attributes {dimension_semantics = [#tpu.dimension_semantics<parallel>, #tpu.dimension_semantics<arbitrary>], iteration_bounds = array<i64: 1, 3>, scalar_prefetch = 0 : i64, scratch_operands = 1 : i64, tpu.core_type = #tpu.core_type<tc>, window_params = [{transform_indices = @transform_0, window_bounds = array<i64: 128, 128>}, {transform_indices = @transform_1, window_bounds = array<i64: 128, 128>}, {transform_indices = @transform_2, window_bounds = array<i64: 128, 128>}, {transform_indices = @transform_3, window_bounds = array<i64: 128, 128>}, {transform_indices = @transform_4, window_bounds = array<i64: 128, 128>}]} {
    %c0_i32 = arith.constant 0 : i32
    %0 = arith.cmpi eq, %arg1, %c0_i32 : i32
    %1 = arith.extui %0 : i1 to i32
    %c0_i32_0 = arith.constant 0 : i32
    %2 = arith.cmpi ne, %1, %c0_i32_0 : i32
    scf.if %2 {
      %cst_16 = arith.constant 0.000000e+00 : f32
      %24 = vector.broadcast %cst_16 : f32 to vector<128x128xf32>
      %c0_17 = arith.constant 0 : index
      %c0_18 = arith.constant 0 : index
      %25 = vector.load %arg7[%c0_17, %c0_18] : memref<128x128xf32, #tpu.memory_space<vmem>>, vector<128x128xf32>
      tpu.vector_store %arg7[%c0_17, %c0_18], %24 {strides = array<i32>} : memref<128x128xf32, #tpu.memory_space<vmem>>, vector<128x128xf32>,
    } else {
    }
    %c0 = arith.constant 0 : index
    %c0_1 = arith.constant 0 : index
    %3 = vector.load %arg2[%c0, %c0_1] : memref<128x128xbf16, #tpu.memory_space<vmem>>, vector<128x128xbf16>
    %c0_2 = arith.constant 0 : index
    %c0_3 = arith.constant 0 : index
    %4 = vector.load %arg3[%c0_2, %c0_3] : memref<128x128xbf16, #tpu.memory_space<vmem>>, vector<128x128xbf16>
    %cst = arith.constant dense<0.000000e+00> : vector<128x128xf32>
    %5 = tpu.matmul %3, %4, %cst {dimension_numbers = #tpu.dot_dimension_numbers<[1], [0], [0], [1], [0, 0, 1, 1], [], []>} : vector<128x128xbf16>, vector<128x128xbf16>, vector<128x128xf32> -> vector<128x128xf32>
    %c0_4 = arith.constant 0 : index
    %c0_5 = arith.constant 0 : index
    %6 = vector.load %arg4[%c0_4, %c0_5] : memref<128x128xbf16, #tpu.memory_space<vmem>>, vector<128x128xbf16>
    %cst_6 = arith.constant dense<0.000000e+00> : vector<128x128xf32>
    %7 = tpu.matmul %3, %6, %cst_6 {dimension_numbers = #tpu.dot_dimension_numbers<[1], [0], [0], [1], [0, 0, 1, 1], [], []>} : vector<128x128xbf16>, vector<128x128xbf16>, vector<128x128xf32> -> vector<128x128xf32>
    %8 = arith.negf %5 : vector<128x128xf32>
    %9 = math.exp %8 : vector<128x128xf32>
    %cst_7 = arith.constant 1.000000e+00 : f32
    %10 = vector.broadcast %cst_7 : f32 to vector<128x128xf32>
    %11 = arith.addf %10, %9 : vector<128x128xf32>
    %12 = arith.divf %10, %11 : vector<128x128xf32>
    %13 = arith.mulf %5, %12 : vector<128x128xf32>
    %14 = arith.mulf %13, %7 : vector<128x128xf32>
    %15 = arith.truncf %14 : vector<128x128xf32> to vector<128x128xbf16>
    %c0_8 = arith.constant 0 : index
    %c0_9 = arith.constant 0 : index
    %16 = vector.load %arg7[%c0_8, %c0_9] : memref<128x128xf32, #tpu.memory_space<vmem>>, vector<128x128xf32>
    %c0_10 = arith.constant 0 : index
    %c0_11 = arith.constant 0 : index
    %17 = vector.load %arg5[%c0_10, %c0_11] : memref<128x128xbf16, #tpu.memory_space<vmem>>, vector<128x128xbf16>
    %cst_12 = arith.constant dense<0.000000e+00> : vector<128x128xf32>
    %18 = tpu.matmul %15, %17, %cst_12 {dimension_numbers = #tpu.dot_dimension_numbers<[1], [0], [0], [1], [0, 0, 1, 1], [], []>} : vector<128x128xbf16>, vector<128x128xbf16>, vector<128x128xf32> -> vector<128x128xf32>
    %19 = arith.addf %16, %18 : vector<128x128xf32>
    %c0_13 = arith.constant 0 : index
    %c0_14 = arith.constant 0 : index
    %20 = vector.load %arg7[%c0_13, %c0_14] : memref<128x128xf32, #tpu.memory_space<vmem>>, vector<128x128xf32>
    tpu.vector_store %arg7[%c0_13, %c0_14], %19 {strides = array<i32>} : memref<128x128xf32, #tpu.memory_space<vmem>>, vector<128x128xf32>,
    %c2_i32 = arith.constant 2 : i32
    %21 = arith.cmpi eq, %arg1, %c2_i32 : i32
    %22 = arith.extui %21 : i1 to i32
    %c0_i32_15 = arith.constant 0 : i32
    %23 = arith.cmpi ne, %22, %c0_i32_15 : i32
    scf.if %23 {
      %c0_16 = arith.constant 0 : index
      %c0_17 = arith.constant 0 : index
      %24 = vector.load %arg7[%c0_16, %c0_17] : memref<128x128xf32, #tpu.memory_space<vmem>>, vector<128x128xf32>
      %c0_18 = arith.constant 0 : index
      %c0_19 = arith.constant 0 : index
      %25 = vector.load %arg6[%c0_18, %c0_19] : memref<128x128xf32, #tpu.memory_space<vmem>>, vector<128x128xf32>
      tpu.vector_store %arg6[%c0_18, %c0_19], %24 {strides = array<i32>} : memref<128x128xf32, #tpu.memory_space<vmem>>, vector<128x128xf32>,
    } else {
    }
    return
  }
  func.func @transform_0(%arg0: i32, %arg1: i32) -> (i32, i32) {
    %c0_i32 = arith.constant 0 : i32
    %c0_i32_0 = arith.constant 0 : i32
    return %arg0, %c0_i32 : i32, i32
  }
  func.func @transform_1(%arg0: i32, %arg1: i32) -> (i32, i32) {
    %c0_i32 = arith.constant 0 : i32
    %c0_i32_0 = arith.constant 0 : i32
    return %c0_i32, %arg1 : i32, i32
  }
  func.func @transform_2(%arg0: i32, %arg1: i32) -> (i32, i32) {
    %c0_i32 = arith.constant 0 : i32
    %c0_i32_0 = arith.constant 0 : i32
    return %c0_i32, %arg1 : i32, i32
  }
  func.func @transform_3(%arg0: i32, %arg1: i32) -> (i32, i32) {
    %c0_i32 = arith.constant 0 : i32
    %c0_i32_0 = arith.constant 0 : i32
    return %arg1, %c0_i32 : i32, i32
  }
  func.func @transform_4(%arg0: i32, %arg1: i32) -> (i32, i32) {
    %c0_i32 = arith.constant 0 : i32
    %c0_i32_0 = arith.constant 0 : i32
    return %arg0, %c0_i32 : i32, i32
  }
}

</mosaic_0001>

<llo_original>
// kernel: tpu_custom_call.1
$region0: #{tpu_custom_call.1}
  #allocation0 [shape = 'u32[]', space=smem, size = 0x4, offset = 0x4, fixed_abs, tag = 'smem constant byte address 0x4 - core index']
  #allocation1 [shape = 'u32[144,128]{1,0:T(1,128)}', space=vmem, size = 0x12000, scoped, tag = 'internal scratch']
  #allocation2 [shape = 'f32[128,128]{1,0:T(8,128)}', space=vmem, size = 0x10000, scoped, tag = 'scratch operand']
  %s0 = inlined_call_operand.hbm [shape: bf16[128,128], index: 0, kind: input, shape index: {}]
  %s1 = inlined_call_operand.hbm [shape: bf16[128,384], index: 1, kind: input, shape index: {}]
  %s2 = inlined_call_operand.hbm [shape: bf16[128,384], index: 2, kind: input, shape index: {}]
  %s3 = inlined_call_operand.hbm [shape: bf16[384,128], index: 3, kind: input, shape index: {}]
  %s4 = inlined_call_operand.hbm [shape: f32[128,128], index: 4, kind: output, shape index: {}]
  %s5 = sld [smem:[#allocation0]]
  $region73: #{tpu_custom_call.1} parent=0
    _
  %s7 = ssub.s32 1, %s5
  %s8 = scalar_select 0, %s7, %s5
  $region1: #{tpu_custom_call.1} parent=0
    #allocation3 [shape = 'u8[32768]{0}', space=vmem, size = 0x8000, scoped, tag = 'input window, operand 0, single buffered']
    #allocation4 [shape = 's32[2]{0}', space=sflag, size = 0x8, scoped, tag = 'scoped memory for tpu_custom_call.1']
    #allocation5 [shape = 's32[2]{0}', space=sflag, size = 0x8, scoped, tag = 'scoped memory for tpu_custom_call.1']
    #allocation6 [shape = 'u8[65536]{0}', space=vmem, size = 0x10000, scoped, tag = 'input window, operand 1']
    #allocation7 [shape = 's32[2]{0}', space=sflag, size = 0x8, scoped, tag = 'scoped memory for tpu_custom_call.1']
    #allocation8 [shape = 'u8[65536]{0}', space=vmem, size = 0x10000, scoped, tag = 'input window, operand 2']
    #allocation9 [shape = 'u8[65536]{0}', space=vmem, size = 0x10000, scoped, tag = 'input window, operand 3']
    #allocation10 [shape = 's32[2]{0}', space=sflag, size = 0x8, scoped, tag = 'scoped memory for tpu_custom_call.1']
    #allocation11 [shape = 'u8[65536]{0}', space=vmem, size = 0x10000, scoped, tag = 'output window, operand 0, single buffered']
    %9 = vsyncpa [#allocation4], 0
    %10 = vsyncpa [#allocation7], 0
    %s11 = scalar_lea.sflag [#allocation7], 1
    %12 = vsyncpa %s11, 0
    %13 = vsyncpa [#allocation10], 0
    %s14 = scalar_lea.sflag [#allocation10], 1
    %15 = vsyncpa %s14, 0
    %16 = vsyncpa [#allocation5], 0
    loop: start=0, step=1, limit=5
    $region2: #{tpu_custom_call.1} parent=1 // loop_pre_header
      _
    $region3: #{tpu_custom_call.1} parent=1 // loop_header
      %s18 = sphi 0, %s22
      %p19 = scmp.ge.s32.totalorder %s18, 5
      %s25 = sphi 0, %s37
      %s26 = sphi 0, %s33
      %s27 = sphi 0, %s25
      %s28 = sphi 0, %s26
      %s29 = sphi 0, %s27
      %s30 = sphi 0, %s28
      %s40 = sphi 0, %s42
      %s43 = sphi 0, %s40
      %s44 = sphi 0, %s43
      %s60 = sphi 0, %s44
      %s66 = sphi 0, %s68
      %s69 = sphi 0, %s66
      %s70 = sphi 0, %s69
      %s86 = sphi 0, %s70
      %s92 = sphi 0, %s94
      %s95 = sphi 0, %s92
      %s96 = sphi 0, %s95
      %s112 = sphi 0, %s96
      %s118 = sphi 0, %s120
      %s121 = sphi 0, %s118
      %s122 = sphi 0, %s121
      %s138 = sphi 0, %s122
      %s144 = sphi 0, %s146
      %s147 = sphi 0, %s144
      %s148 = sphi 0, %s147
      %s164 = sphi 0, %s148
    $region4: #{tpu_custom_call.1} parent=1 // loop_header_branch
      %21 = sbr.rel (%p19) target = $region8
    $region5: #{tpu_custom_call.1} parent=1 // loop_body
      %s23 = ssub.s32 %s18, 1
      %s24 = ssub.s32 %s18, 2
      %s31 = sadd.s32 1, %s26
      %p32 = scmp.ge.s32.totalorder %s31, 3
      %s33 = scalar_select %p32, 0, %s31
      %s34 = sadd.s32 1, %s25
      %s35 = scalar_select %p32, %s34, %s25
      %p36 = scmp.ge.s32.totalorder %s35, 1
      %s37 = scalar_select %p36, 0, %s35
      %s38 = ssub.s32 %s25, %s37
      %p39 = scmp.eq.s32.totalorder %s38, 0
      %s41 = sadd.s32 %s40, 1
      %s42 = scalar_select %p39, %s40, %s41
      %p45 = pneg %p39
      %p46 = scmp.eq.s32.totalorder %s18, 2
      %p47 = por %p45, %p46
      %p48 = scmp.ne.s32.totalorder %s40, %s43
      %p49 = scmp.eq.s32.totalorder %s18, 0
      %p50 = por %p48, %p49
      %p51 = scmp.ne.s32.totalorder %s40, %s43
      %p52 = scmp.eq.s32.totalorder %s23, 2
      %p53 = por %p51, %p52
      %p54 = scmp.ne.s32.totalorder %s43, %s44
      %p55 = scmp.eq.s32.totalorder %s23, 0
      %p56 = por %p54, %p55
      %p57 = scmp.ne.s32.totalorder %s43, %s44
      %p58 = scmp.eq.s32.totalorder %s24, 2
      %p59 = por %p57, %p58
      %p61 = scmp.ne.s32.totalorder %s44, %s60
      %p62 = scmp.eq.s32.totalorder %s24, 0
      %p63 = por %p61, %p62
      %s64 = ssub.s32 %s26, %s33
      %p65 = scmp.eq.s32.totalorder %s64, 0
      %s67 = sadd.s32 %s66, 1
      %s68 = scalar_select %p65, %s66, %s67
      %p71 = pneg %p65
      %p72 = scmp.eq.s32.totalorder %s18, 2
      %p73 = por %p71, %p72
      %p74 = scmp.ne.s32.totalorder %s66, %s69
      %p75 = scmp.eq.s32.totalorder %s18, 0
      %p76 = por %p74, %p75
      %p77 = scmp.ne.s32.totalorder %s66, %s69
      %p78 = scmp.eq.s32.totalorder %s23, 2
      %p79 = por %p77, %p78
      %p80 = scmp.ne.s32.totalorder %s69, %s70
      %p81 = scmp.eq.s32.totalorder %s23, 0
      %p82 = por %p80, %p81
      %p83 = scmp.ne.s32.totalorder %s69, %s70
      %p84 = scmp.eq.s32.totalorder %s24, 2
      %p85 = por %p83, %p84
      %p87 = scmp.ne.s32.totalorder %s70, %s86
      %p88 = scmp.eq.s32.totalorder %s24, 0
      %p89 = por %p87, %p88
      %s90 = ssub.s32 %s26, %s33
      %p91 = scmp.eq.s32.totalorder %s90, 0
      %s93 = sadd.s32 %s92, 1
      %s94 = scalar_select %p91, %s92, %s93
      %p97 = pneg %p91
      %p98 = scmp.eq.s32.totalorder %s18, 2
      %p99 = por %p97, %p98
      %p100 = scmp.ne.s32.totalorder %s92, %s95
      %p101 = scmp.eq.s32.totalorder %s18, 0
      %p102 = por %p100, %p101
      %p103 = scmp.ne.s32.totalorder %s92, %s95
      %p104 = scmp.eq.s32.totalorder %s23, 2
      %p105 = por %p103, %p104
      %p106 = scmp.ne.s32.totalorder %s95, %s96
      %p107 = scmp.eq.s32.totalorder %s23, 0
      %p108 = por %p106, %p107
      %p109 = scmp.ne.s32.totalorder %s95, %s96
      %p110 = scmp.eq.s32.totalorder %s24, 2
      %p111 = por %p109, %p110
      %p113 = scmp.ne.s32.totalorder %s96, %s112
      %p114 = scmp.eq.s32.totalorder %s24, 0
      %p115 = por %p113, %p114
      %s116 = ssub.s32 %s26, %s33
      %p117 = scmp.eq.s32.totalorder %s116, 0
      %s119 = sadd.s32 %s118, 1
      %s120 = scalar_select %p117, %s118, %s119
      %p123 = pneg %p117
      %p124 = scmp.eq.s32.totalorder %s18, 2
      %p125 = por %p123, %p124
      %p126 = scmp.ne.s32.totalorder %s118, %s121
      %p127 = scmp.eq.s32.totalorder %s18, 0
      %p128 = por %p126, %p127
      %p129 = scmp.ne.s32.totalorder %s118, %s121
      %p130 = scmp.eq.s32.totalorder %s23, 2
      %p131 = por %p129, %p130
      %p132 = scmp.ne.s32.totalorder %s121, %s122
      %p133 = scmp.eq.s32.totalorder %s23, 0
      %p134 = por %p132, %p133
      %p135 = scmp.ne.s32.totalorder %s121, %s122
      %p136 = scmp.eq.s32.totalorder %s24, 2
      %p137 = por %p135, %p136
      %p139 = scmp.ne.s32.totalorder %s122, %s138
      %p140 = scmp.eq.s32.totalorder %s24, 0
      %p141 = por %p139, %p140
      %s142 = ssub.s32 %s25, %s37
      %p143 = scmp.eq.s32.totalorder %s142, 0
      %s145 = sadd.s32 %s144, 1
      %s146 = scalar_select %p143, %s144, %s145
      %p149 = pneg %p143
      %p150 = scmp.eq.s32.totalorder %s18, 2
      %p151 = por %p149, %p150
      %p152 = scmp.ne.s32.totalorder %s144, %s147
      %p153 = scmp.eq.s32.totalorder %s18, 0
      %p154 = por %p152, %p153
      %p155 = scmp.ne.s32.totalorder %s144, %s147
      %p156 = scmp.eq.s32.totalorder %s23, 2
      %p157 = por %p155, %p156
      %p158 = scmp.ne.s32.totalorder %s147, %s148
      %p159 = scmp.eq.s32.totalorder %s23, 0
      %p160 = por %p158, %p159
      %p161 = scmp.ne.s32.totalorder %s147, %s148
      %p162 = scmp.eq.s32.totalorder %s24, 2
      %p163 = por %p161, %p162
      %p165 = scmp.ne.s32.totalorder %s148, %s164
      %p166 = scmp.eq.s32.totalorder %s24, 0
      %p167 = por %p165, %p166
      %p168 = scmp.le.s32.totalorder 1, %s18
      %p169 = scmp.lt.s32.totalorder %s18, 4
      %p170 = pnand %p168, %p169
      %p171 = pneg %p170
      // Predicated region
      $region9: #{tpu_custom_call.1} parent=5 // pred_check
        _
      $region10: #{tpu_custom_call.1} parent=5 // pred_check_branch
        %173 = sbr.rel (%p170) target = $region12
      $region11: #{tpu_custom_call.1} parent=5 // pred_region
        %s174 = ssub.s32 %s18, 1
        // Predicated region
        $region13: #{tpu_custom_call.1} parent=11 // pred_check
          %p175 = pneg %p56
        $region14: #{tpu_custom_call.1} parent=11 // pred_check_branch
          %177 = sbr.rel (%p175) target = $region16
        $region15: #{tpu_custom_call.1} parent=11 // pred_region
          %s178 = smul.u32 16, %s27
          %s180 = ssub.s32 1024, 1024
          %181 = vsyncadd [#allocation4], %s180
          %s182 = smul.addr %s178, 64
          %s183 = scalar_lea.hbm %s0, %s182
          %s184 = sshll.u32 [#allocation3], 4
          %s185 = int_to_ptr.vmem [resolvable:$true] %s184
          %190 = dma.hbm_to_vmem [thread:$0]  %s183, 1024, %s185, [#allocation4], 64, 64, 4
        $region16: #{tpu_custom_call.1} parent=11 // pred_fallthru
          _
      $region12: #{tpu_custom_call.1} parent=5 // pred_fallthru
        _
      %p191 = scmp.lt.s32.totalorder %s18, 3
      // Predicated region
      $region17: #{tpu_custom_call.1} parent=5 // pred_check
        %p192 = pneg %p191
      $region18: #{tpu_custom_call.1} parent=5 // pred_check_branch
        %194 = sbr.rel (%p192) target = $region20
      $region19: #{tpu_custom_call.1} parent=5 // pred_region
        // Predicated region
        $region21: #{tpu_custom_call.1} parent=19 // pred_check
          %p195 = pneg %p76
        $region22: #{tpu_custom_call.1} parent=19 // pred_check_branch
          %197 = sbr.rel (%p195) target = $region24
        $region23: #{tpu_custom_call.1} parent=19 // pred_region
          %s198 = sand.u32 %s18, 1
          %s199 = scalar_lea.sflag [#allocation7], %s198
          %s200 = sand.u32 %s66, 1
          %s201 = smul.addr %s200, 64
          %s202 = scalar_lea.vmem [#allocation6], %s201
          %s204 = ssub.s32 1024, 1024
          %205 = vsyncadd %s199, %s204
          %s206 = smul.addr %s26, 64
          %s207 = scalar_lea.hbm %s1, %s206
          %s208 = sshll.u32 %s202, 4
          %s209 = int_to_ptr.vmem [resolvable:$true] %s208
          %214 = dma.hbm_to_vmem [thread:$0]  %s207, 1024, %s209, %s199, 192, 64, 4
        $region24: #{tpu_custom_call.1} parent=19 // pred_fallthru
          _
        // Predicated region
        $region25: #{tpu_custom_call.1} parent=19 // pred_check
          %p215 = pneg %p102
        $region26: #{tpu_custom_call.1} parent=19 // pred_check_branch
          %217 = sbr.rel (%p215) target = $region28
        $region27: #{tpu_custom_call.1} parent=19 // pred_region
          %s218 = sand.u32 %s18, 1
          %s219 = scalar_lea.sflag [#allocation7], %s218
          %s220 = sand.u32 %s92, 1
          %s221 = smul.addr %s220, 64
          %s222 = scalar_lea.vmem [#allocation8], %s221
          %s224 = ssub.s32 1024, 1024
          %225 = vsyncadd %s219, %s224
          %s226 = smul.addr %s26, 64
          %s227 = scalar_lea.hbm %s2, %s226
          %s228 = sshll.u32 %s222, 4
          %s229 = int_to_ptr.vmem [resolvable:$true] %s228
          %234 = dma.hbm_to_vmem [thread:$0]  %s227, 1024, %s229, %s219, 192, 64, 4
        $region28: #{tpu_custom_call.1} parent=19 // pred_fallthru
          _
        // Predicated region
        $region29: #{tpu_custom_call.1} parent=19 // pred_check
          %p235 = pneg %p128
        $region30: #{tpu_custom_call.1} parent=19 // pred_check_branch
          %237 = sbr.rel (%p235) target = $region32
        $region31: #{tpu_custom_call.1} parent=19 // pred_region
          %s238 = sand.u32 %s118, 1
          %s239 = scalar_lea.sflag [#allocation10], %s238
          %s240 = sand.u32 %s118, 1
          %s241 = smul.addr %s240, 64
          %s242 = scalar_lea.vmem [#allocation9], %s241
          %s243 = smul.u32 16, %s26
          %s245 = ssub.s32 1024, 1024
          %246 = vsyncadd %s239, %s245
          %s247 = smul.addr %s243, 64
          %s248 = scalar_lea.hbm %s3, %s247
          %s249 = sshll.u32 %s242, 4
          %s250 = int_to_ptr.vmem [resolvable:$true] %s249
          %255 = dma.hbm_to_vmem [thread:$0]  %s248, 1024, %s250, %s239, 64, 64, 4
        $region32: #{tpu_custom_call.1} parent=19 // pred_fallthru
          _
      $region20: #{tpu_custom_call.1} parent=5 // pred_fallthru
        _
      %p256 = scmp.le.s32.totalorder 1, %s18
      %p257 = scmp.lt.s32.totalorder %s18, 4
      %p258 = pnand %p256, %p257
      %p259 = pneg %p258
      // Predicated region
      $region33: #{tpu_custom_call.1} parent=5 // pred_check
        _
      $region34: #{tpu_custom_call.1} parent=5 // pred_check_branch
        %261 = sbr.rel (%p258) target = $region36
      $region35: #{tpu_custom_call.1} parent=5 // pred_region
        %s262 = ssub.s32 %s18, 1
        // Predicated region
        $region37: #{tpu_custom_call.1} parent=35 // pred_check
          %p263 = pneg %p56
        $region38: #{tpu_custom_call.1} parent=35 // pred_check_branch
          %265 = sbr.rel (%p263) target = $region40
        $region39: #{tpu_custom_call.1} parent=35 // pred_region
          %266 = dma.done [#allocation4], 1024
        $region40: #{tpu_custom_call.1} parent=35 // pred_fallthru
          _
        %s267 = sand.u32 %s23, 1
        %s268 = scalar_lea.sflag [#allocation7], %s267
        %s269 = sand.u32 %s69, 1
        %s270 = smul.addr %s269, 64
        %s271 = scalar_lea.vmem [#allocation6], %s270
        // Predicated region
        $region41: #{tpu_custom_call.1} parent=35 // pred_check
          %p272 = pneg %p82
        $region42: #{tpu_custom_call.1} parent=35 // pred_check_branch
          %274 = sbr.rel (%p272) target = $region44
        $region43: #{tpu_custom_call.1} parent=35 // pred_region
          %275 = dma.done %s268, 1024
        $region44: #{tpu_custom_call.1} parent=35 // pred_fallthru
          _
        %s276 = sand.u32 %s23, 1
        %s277 = scalar_lea.sflag [#allocation7], %s276
        %s278 = sand.u32 %s95, 1
        %s279 = smul.addr %s278, 64
        %s280 = scalar_lea.vmem [#allocation8], %s279
        // Predicated region
        $region45: #{tpu_custom_call.1} parent=35 // pred_check
          %p281 = pneg %p108
        $region46: #{tpu_custom_call.1} parent=35 // pred_check_branch
          %283 = sbr.rel (%p281) target = $region48
        $region47: #{tpu_custom_call.1} parent=35 // pred_region
          %284 = dma.done %s277, 1024
        $region48: #{tpu_custom_call.1} parent=35 // pred_fallthru
          _
        %s285 = sand.u32 %s121, 1
        %s286 = scalar_lea.sflag [#allocation10], %s285
        %s287 = sand.u32 %s121, 1
        %s288 = smul.addr %s287, 64
        %s289 = scalar_lea.vmem [#allocation9], %s288
        // Predicated region
        $region49: #{tpu_custom_call.1} parent=35 // pred_check
          %p290 = pneg %p134
        $region50: #{tpu_custom_call.1} parent=35 // pred_check_branch
          %292 = sbr.rel (%p290) target = $region52
        $region51: #{tpu_custom_call.1} parent=35 // pred_region
          %293 = dma.done %s286, 1024
        $region52: #{tpu_custom_call.1} parent=35 // pred_fallthru
          _
        %p294 = pneg %p56
        %p295 = pneg %p53
        %s296 = sand.u32 %s23, 1
        %s297 = scalar_lea.sflag [#allocation7], %s296
        %s298 = sand.u32 %s69, 1
        %s299 = smul.addr %s298, 64
        %s300 = scalar_lea.vmem [#allocation6], %s299
        %p301 = pneg %p82
        %p302 = pneg %p79
        %s303 = sand.u32 %s23, 1
        %s304 = scalar_lea.sflag [#allocation7], %s303
        %s305 = sand.u32 %s95, 1
        %s306 = smul.addr %s305, 64
        %s307 = scalar_lea.vmem [#allocation8], %s306
        %p308 = pneg %p108
        %p309 = pneg %p105
        %s310 = sand.u32 %s121, 1
        %s311 = scalar_lea.sflag [#allocation10], %s310
        %s312 = sand.u32 %s121, 1
        %s313 = smul.addr %s312, 64
        %s314 = scalar_lea.vmem [#allocation9], %s313
        %p315 = pneg %p134
        %p316 = pneg %p131
        %p317 = pneg %p160
        %p318 = pneg %p157
        %s319 = smul.u32 16, %s27
        %s320 = smul.u32 16, %s28
        %s321 = smul.u32 16, %s27
        %p323 = scmp.eq.s32.totalorder %s28, 0
        // Predicated region
        $region53: #{tpu_custom_call.1} parent=35 // pred_check
          %p324 = pneg %p323
        $region54: #{tpu_custom_call.1} parent=35 // pred_check_branch
          %326 = sbr.rel (%p324) target = $region56
        $region55: #{tpu_custom_call.1} parent=35 // pred_region
          %327 = vst [vmem:[#allocation2] sm:$0xff] 0.0
          %328 = vst [vmem:[#allocation2 + $0x8] sm:$0xff] 0.0
          %329 = vst [vmem:[#allocation2 + $0x10] sm:$0xff] 0.0
          %330 = vst [vmem:[#allocation2 + $0x18] sm:$0xff] 0.0
          %331 = vst [vmem:[#allocation2 + $0x20] sm:$0xff] 0.0
          %332 = vst [vmem:[#allocation2 + $0x28] sm:$0xff] 0.0
          %333 = vst [vmem:[#allocation2 + $0x30] sm:$0xff] 0.0
          %334 = vst [vmem:[#allocation2 + $0x38] sm:$0xff] 0.0
          %335 = vst [vmem:[#allocation2 + $0x40] sm:$0xff] 0.0
          %336 = vst [vmem:[#allocation2 + $0x48] sm:$0xff] 0.0
          %337 = vst [vmem:[#allocation2 + $0x50] sm:$0xff] 0.0
          %338 = vst [vmem:[#allocation2 + $0x58] sm:$0xff] 0.0
          %339 = vst [vmem:[#allocation2 + $0x60] sm:$0xff] 0.0
          %340 = vst [vmem:[#allocation2 + $0x68] sm:$0xff] 0.0
          %341 = vst [vmem:[#allocation2 + $0x70] sm:$0xff] 0.0
          %342 = vst [vmem:[#allocation2 + $0x78] sm:$0xff] 0.0
        $region56: #{tpu_custom_call.1} parent=35 // pred_fallthru
          _
        %v343 = vld [vmem:[#allocation3] sm:$0xf]
        %v344 = vld [vmem:[#allocation3 + $0x4] sm:$0xf]
        %v345 = vld [vmem:[#allocation3 + $0x8] sm:$0xf]
        %v346 = vld [vmem:[#allocation3 + $0xc] sm:$0xf]
        %v347 = vld [vmem:[#allocation3 + $0x10] sm:$0xf]
        %v348 = vld [vmem:[#allocation3 + $0x14] sm:$0xf]
        %v349 = vld [vmem:[#allocation3 + $0x18] sm:$0xf]
        %v350 = vld [vmem:[#allocation3 + $0x1c] sm:$0xf]
        %v351 = vld [vmem:[#allocation3 + $0x20] sm:$0xf]
        %v352 = vld [vmem:[#allocation3 + $0x24] sm:$0xf]
        %v353 = vld [vmem:[#allocation3 + $0x28] sm:$0xf]
        %v354 = vld [vmem:[#allocation3 + $0x2c] sm:$0xf]
        %v355 = vld [vmem:[#allocation3 + $0x30] sm:$0xf]
        %v356 = vld [vmem:[#allocation3 + $0x34] sm:$0xf]
        %v357 = vld [vmem:[#allocation3 + $0x38] sm:$0xf]
        %v358 = vld [vmem:[#allocation3 + $0x3c] sm:$0xf]
        %v359 = vld [vmem:[%s271] sm:$0xf]
        %v360 = vld [vmem:[%s271 + $0x4] sm:$0xf]
        %v361 = vld [vmem:[%s271 + $0x8] sm:$0xf]
        %v362 = vld [vmem:[%s271 + $0xc] sm:$0xf]
        %v363 = vld [vmem:[%s271 + $0x10] sm:$0xf]
        %v364 = vld [vmem:[%s271 + $0x14] sm:$0xf]
        %v365 = vld [vmem:[%s271 + $0x18] sm:$0xf]
        %v366 = vld [vmem:[%s271 + $0x1c] sm:$0xf]
        %v367 = vld [vmem:[%s271 + $0x20] sm:$0xf]
        %v368 = vld [vmem:[%s271 + $0x24] sm:$0xf]
        %v369 = vld [vmem:[%s271 + $0x28] sm:$0xf]
        %v370 = vld [vmem:[%s271 + $0x2c] sm:$0xf]
        %v371 = vld [vmem:[%s271 + $0x30] sm:$0xf]
        %v372 = vld [vmem:[%s271 + $0x34] sm:$0xf]
        %v373 = vld [vmem:[%s271 + $0x38] sm:$0xf]
        %v374 = vld [vmem:[%s271 + $0x3c] sm:$0xf]
        %v391 = vunpack.c.l.b16 %v343
        %v392 = vunpack.c.l.b16 %v344
        %v393 = vunpack.c.l.b16 %v345
        %v394 = vunpack.c.l.b16 %v346
        %v395 = vunpack.c.l.b16 %v347
        %v396 = vunpack.c.l.b16 %v348
        %v397 = vunpack.c.l.b16 %v349
        %v398 = vunpack.c.l.b16 %v350
        %v399 = vunpack.c.l.b16 %v351
        %v400 = vunpack.c.l.b16 %v352
        %v401 = vunpack.c.l.b16 %v353
        %v402 = vunpack.c.l.b16 %v354
        %v403 = vunpack.c.l.b16 %v355
        %v404 = vunpack.c.l.b16 %v356
        %v405 = vunpack.c.l.b16 %v357
        %v406 = vunpack.c.l.b16 %v358
        %v407 = vpack.c.b16 %v392, %v391
        %v408 = vpack.c.b16 %v394, %v393
        %v409 = vpack.c.b16 %v396, %v395
        %v410 = vpack.c.b16 %v398, %v397
        %v411 = vpack.c.b16 %v400, %v399
        %v412 = vpack.c.b16 %v402, %v401
        %v413 = vpack.c.b16 %v404, %v403
        %v414 = vpack.c.b16 %v406, %v405
        %v439 = vunpack.c.l.b16 %v359
        %v440 = vunpack.c.l.b16 %v360
        %v441 = vunpack.c.l.b16 %v361
        %v442 = vunpack.c.l.b16 %v362
        %v443 = vunpack.c.l.b16 %v363
        %v444 = vunpack.c.l.b16 %v364
        %v445 = vunpack.c.l.b16 %v365
        %v446 = vunpack.c.l.b16 %v366
        %v447 = vunpack.c.l.b16 %v367
        %v448 = vunpack.c.l.b16 %v368
        %v449 = vunpack.c.l.b16 %v369
        %v450 = vunpack.c.l.b16 %v370
        %v451 = vunpack.c.l.b16 %v371
        %v452 = vunpack.c.l.b16 %v372
        %v453 = vunpack.c.l.b16 %v373
        %v454 = vunpack.c.l.b16 %v374
        %v455 = vpack.c.b16 %v440, %v439
        %v456 = vpack.c.b16 %v442, %v441
        %v457 = vpack.c.b16 %v444, %v443
        %v458 = vpack.c.b16 %v446, %v445
        %v459 = vpack.c.b16 %v448, %v447
        %v460 = vpack.c.b16 %v450, %v449
        %v461 = vpack.c.b16 %v452, %v451
        %v462 = vpack.c.b16 %v454, %v453
        %471 = vmatprep.subr.bf16.mxu0 0
        %472 = vmatpush1.bf16.msra.mxu0 %v462
        %473 = vmatprep.subr.bf16.mxu0 0
        %474 = vmatpush1.bf16.msra.mxu0 %v461
        %475 = vmatprep.subr.bf16.mxu0 0
        %476 = vmatpush1.bf16.msra.mxu0 %v460
        %477 = vmatprep.subr.bf16.mxu0 0
        %478 = vmatpush1.bf16.msra.mxu0 %v459
        %479 = vmatprep.subr.bf16.mxu0 0
        %480 = vmatpush1.bf16.msra.mxu0 %v458
        %481 = vmatprep.subr.bf16.mxu0 0
        %482 = vmatpush1.bf16.msra.mxu0 %v457
        %483 = vmatprep.subr.bf16.mxu0 0
        %484 = vmatpush1.bf16.msra.mxu0 %v456
        %485 = vmatprep.subr.bf16.mxu0 0
        %486 = vmatpush1.bf16.msra.mxu0 %v455
        %487 = vmatprep.subr.bf16.mxu0 0
        %488 = vmatpush2.bf16.msra.mxu0 0
        %489 = vmatprep.subr.bf16.mxu0 0
        %490 = vmatpush2.bf16.msra.mxu0 0
        %491 = vmatprep.subr.bf16.mxu0 0
        %492 = vmatpush2.bf16.msra.mxu0 0
        %493 = vmatprep.subr.bf16.mxu0 0
        %494 = vmatpush2.bf16.msra.mxu0 0
        %495 = vmatprep.subr.bf16.mxu0 0
        %496 = vmatpush2.bf16.msra.mxu0 0
        %497 = vmatprep.subr.bf16.mxu0 0
        %498 = vmatpush2.bf16.msra.mxu0 0
        %499 = vmatprep.subr.bf16.mxu0 0
        %500 = vmatpush2.bf16.msra.mxu0 0
        %501 = vmatprep.subr.bf16.mxu0 0
        %502 = vmatpush2.bf16.msra.mxu0 0
        %503 = vmatprep.mubr.bf16.mxu0 0
        %504 = vmatmul.mubr.bf16.gmra.mxu0 %v407
        %v505 = vpop.f32.mrf.mxu0
        %v506 = vadd.f32 0.0, %v505
        %v507 = vpop.f32.mrf.mxu0
        %v508 = vpop.f32.mrf.mxu0
        %v509 = vadd.f32 0.0, %v508
        %v510 = vpop.f32.mrf.mxu0
        %511 = vmatprep.mubr.bf16.mxu0 0
        %512 = vmatmul.mubr.bf16.gmra.mxu0 %v408
        %v513 = vpop.f32.mrf.mxu0
        %v514 = vadd.f32 0.0, %v513
        %v515 = vpop.f32.mrf.mxu0
        %v516 = vpop.f32.mrf.mxu0
        %v517 = vadd.f32 0.0, %v516
        %v518 = vpop.f32.mrf.mxu0
        %519 = vmatprep.mubr.bf16.mxu0 0
        %520 = vmatmul.mubr.bf16.gmra.mxu0 %v409
        %v521 = vpop.f32.mrf.mxu0
        %v522 = vadd.f32 0.0, %v521
        %v523 = vpop.f32.mrf.mxu0
        %v524 = vpop.f32.mrf.mxu0
        %v525 = vadd.f32 0.0, %v524
        %v526 = vpop.f32.mrf.mxu0
        %527 = vmatprep.mubr.bf16.mxu0 0
        %528 = vmatmul.mubr.bf16.gmra.mxu0 %v410
        %v529 = vpop.f32.mrf.mxu0
        %v530 = vadd.f32 0.0, %v529
        %v531 = vpop.f32.mrf.mxu0
        %v532 = vpop.f32.mrf.mxu0
        %v533 = vadd.f32 0.0, %v532
        %v534 = vpop.f32.mrf.mxu0
        %535 = vmatprep.mubr.bf16.mxu0 0
        %536 = vmatmul.mubr.bf16.gmra.mxu0 %v411
        %v537 = vpop.f32.mrf.mxu0
        %v538 = vadd.f32 0.0, %v537
        %v539 = vpop.f32.mrf.mxu0
        %v540 = vpop.f32.mrf.mxu0
        %v541 = vadd.f32 0.0, %v540
        %v542 = vpop.f32.mrf.mxu0
        %543 = vmatprep.mubr.bf16.mxu0 0
        %544 = vmatmul.mubr.bf16.gmra.mxu0 %v412
        %v545 = vpop.f32.mrf.mxu0
        %v546 = vadd.f32 0.0, %v545
        %v547 = vpop.f32.mrf.mxu0
        %v548 = vpop.f32.mrf.mxu0
        %v549 = vadd.f32 0.0, %v548
        %v550 = vpop.f32.mrf.mxu0
        %551 = vmatprep.mubr.bf16.mxu0 0
        %552 = vmatmul.mubr.bf16.gmra.mxu0 %v413
        %v553 = vpop.f32.mrf.mxu0
        %v554 = vadd.f32 0.0, %v553
        %v555 = vpop.f32.mrf.mxu0
        %v556 = vpop.f32.mrf.mxu0
        %v557 = vadd.f32 0.0, %v556
        %v558 = vpop.f32.mrf.mxu0
        %559 = vmatprep.mubr.bf16.mxu0 0
        %560 = vmatmul.mubr.bf16.gmra.mxu0 %v414
        %v561 = vpop.f32.mrf.mxu0
        %v562 = vadd.f32 0.0, %v561
        %v563 = vpop.f32.mrf.mxu0
        %v564 = vpop.f32.mrf.mxu0
        %v565 = vadd.f32 0.0, %v564
        %v566 = vpop.f32.mrf.mxu0
        %567 = vdwg.mxu0
        %v568 = vld [vmem:[%s280] sm:$0xf]
        %v569 = vld [vmem:[%s280 + $0x4] sm:$0xf]
        %v570 = vld [vmem:[%s280 + $0x8] sm:$0xf]
        %v571 = vld [vmem:[%s280 + $0xc] sm:$0xf]
        %v572 = vld [vmem:[%s280 + $0x10] sm:$0xf]
        %v573 = vld [vmem:[%s280 + $0x14] sm:$0xf]
        %v574 = vld [vmem:[%s280 + $0x18] sm:$0xf]
        %v575 = vld [vmem:[%s280 + $0x1c] sm:$0xf]
        %v576 = vld [vmem:[%s280 + $0x20] sm:$0xf]
        %v577 = vld [vmem:[%s280 + $0x24] sm:$0xf]
        %v578 = vld [vmem:[%s280 + $0x28] sm:$0xf]
        %v579 = vld [vmem:[%s280 + $0x2c] sm:$0xf]
        %v580 = vld [vmem:[%s280 + $0x30] sm:$0xf]
        %v581 = vld [vmem:[%s280 + $0x34] sm:$0xf]
        %v582 = vld [vmem:[%s280 + $0x38] sm:$0xf]
        %v583 = vld [vmem:[%s280 + $0x3c] sm:$0xf]
        %v600 = vunpack.c.l.b16 %v568
        %v601 = vunpack.c.l.b16 %v569
        %v602 = vunpack.c.l.b16 %v570
        %v603 = vunpack.c.l.b16 %v571
        %v604 = vunpack.c.l.b16 %v572
        %v605 = vunpack.c.l.b16 %v573
        %v606 = vunpack.c.l.b16 %v574
        %v607 = vunpack.c.l.b16 %v575
        %v608 = vunpack.c.l.b16 %v576
        %v609 = vunpack.c.l.b16 %v577
        %v610 = vunpack.c.l.b16 %v578
        %v611 = vunpack.c.l.b16 %v579
        %v612 = vunpack.c.l.b16 %v580
        %v613 = vunpack.c.l.b16 %v581
        %v614 = vunpack.c.l.b16 %v582
        %v615 = vunpack.c.l.b16 %v583
        %v616 = vpack.c.b16 %v601, %v600
        %v617 = vpack.c.b16 %v603, %v602
        %v618 = vpack.c.b16 %v605, %v604
        %v619 = vpack.c.b16 %v607, %v606
        %v620 = vpack.c.b16 %v609, %v608
        %v621 = vpack.c.b16 %v611, %v610
        %v622 = vpack.c.b16 %v613, %v612
        %v623 = vpack.c.b16 %v615, %v614
        %632 = vmatprep.subr.bf16.mxu0 0
        %633 = vmatpush1.bf16.msra.mxu0 %v623
        %634 = vmatprep.subr.bf16.mxu0 0
        %635 = vmatpush1.bf16.msra.mxu0 %v622
        %636 = vmatprep.subr.bf16.mxu0 0
        %637 = vmatpush1.bf16.msra.mxu0 %v621
        %638 = vmatprep.subr.bf16.mxu0 0
        %639 = vmatpush1.bf16.msra.mxu0 %v620
        %640 = vmatprep.subr.bf16.mxu0 0
        %641 = vmatpush1.bf16.msra.mxu0 %v619
        %642 = vmatprep.subr.bf16.mxu0 0
        %643 = vmatpush1.bf16.msra.mxu0 %v618
        %644 = vmatprep.subr.bf16.mxu0 0
        %645 = vmatpush1.bf16.msra.mxu0 %v617
        %646 = vmatprep.subr.bf16.mxu0 0
        %647 = vmatpush1.bf16.msra.mxu0 %v616
        %648 = vmatprep.subr.bf16.mxu0 0
        %649 = vmatpush2.bf16.msra.mxu0 0
        %650 = vmatprep.subr.bf16.mxu0 0
        %651 = vmatpush2.bf16.msra.mxu0 0
        %652 = vmatprep.subr.bf16.mxu0 0
        %653 = vmatpush2.bf16.msra.mxu0 0
        %654 = vmatprep.subr.bf16.mxu0 0
        %655 = vmatpush2.bf16.msra.mxu0 0
        %656 = vmatprep.subr.bf16.mxu0 0
        %657 = vmatpush2.bf16.msra.mxu0 0
        %658 = vmatprep.subr.bf16.mxu0 0
        %659 = vmatpush2.bf16.msra.mxu0 0
        %660 = vmatprep.subr.bf16.mxu0 0
        %661 = vmatpush2.bf16.msra.mxu0 0
        %662 = vmatprep.subr.bf16.mxu0 0
        %663 = vmatpush2.bf16.msra.mxu0 0
        %664 = vmatprep.mubr.bf16.mxu0 0
        %665 = vmatmul.mubr.bf16.gmra.mxu0 %v407
        %v666 = vpop.f32.mrf.mxu0
        %v667 = vadd.f32 0.0, %v666
        %v668 = vpop.f32.mrf.mxu0
        %v669 = vpop.f32.mrf.mxu0
        %v670 = vadd.f32 0.0, %v669
        %v671 = vpop.f32.mrf.mxu0
        %672 = vmatprep.mubr.bf16.mxu0 0
        %673 = vmatmul.mubr.bf16.gmra.mxu0 %v408
        %v674 = vpop.f32.mrf.mxu0
        %v675 = vadd.f32 0.0, %v674
        %v676 = vpop.f32.mrf.mxu0
        %v677 = vpop.f32.mrf.mxu0
        %v678 = vadd.f32 0.0, %v677
        %v679 = vpop.f32.mrf.mxu0
        %680 = vmatprep.mubr.bf16.mxu0 0
        %681 = vmatmul.mubr.bf16.gmra.mxu0 %v409
        %v682 = vpop.f32.mrf.mxu0
        %v683 = vadd.f32 0.0, %v682
        %v684 = vpop.f32.mrf.mxu0
        %v685 = vpop.f32.mrf.mxu0
        %v686 = vadd.f32 0.0, %v685
        %v687 = vpop.f32.mrf.mxu0
        %688 = vmatprep.mubr.bf16.mxu0 0
        %689 = vmatmul.mubr.bf16.gmra.mxu0 %v410
        %v690 = vpop.f32.mrf.mxu0
        %v691 = vadd.f32 0.0, %v690
        %v692 = vpop.f32.mrf.mxu0
        %v693 = vpop.f32.mrf.mxu0
        %v694 = vadd.f32 0.0, %v693
        %v695 = vpop.f32.mrf.mxu0
        %696 = vmatprep.mubr.bf16.mxu0 0
        %697 = vmatmul.mubr.bf16.gmra.mxu0 %v411
        %v698 = vpop.f32.mrf.mxu0
        %v699 = vadd.f32 0.0, %v698
        %v700 = vpop.f32.mrf.mxu0
        %v701 = vpop.f32.mrf.mxu0
        %v702 = vadd.f32 0.0, %v701
        %v703 = vpop.f32.mrf.mxu0
        %704 = vmatprep.mubr.bf16.mxu0 0
        %705 = vmatmul.mubr.bf16.gmra.mxu0 %v412
        %v706 = vpop.f32.mrf.mxu0
        %v707 = vadd.f32 0.0, %v706
        %v708 = vpop.f32.mrf.mxu0
        %v709 = vpop.f32.mrf.mxu0
        %v710 = vadd.f32 0.0, %v709
        %v711 = vpop.f32.mrf.mxu0
        %712 = vmatprep.mubr.bf16.mxu0 0
        %713 = vmatmul.mubr.bf16.gmra.mxu0 %v413
        %v714 = vpop.f32.mrf.mxu0
        %v715 = vadd.f32 0.0, %v714
        %v716 = vpop.f32.mrf.mxu0
        %v717 = vpop.f32.mrf.mxu0
        %v718 = vadd.f32 0.0, %v717
        %v719 = vpop.f32.mrf.mxu0
        %720 = vmatprep.mubr.bf16.mxu0 0
        %721 = vmatmul.mubr.bf16.gmra.mxu0 %v414
        %v722 = vpop.f32.mrf.mxu0
        %v723 = vadd.f32 0.0, %v722
        %v724 = vpop.f32.mrf.mxu0
        %v725 = vpop.f32.mrf.mxu0
        %v726 = vadd.f32 0.0, %v725
        %v727 = vpop.f32.mrf.mxu0
        %728 = vdwg.mxu0
        %v729 = vxor.u32 %v506, 2147483648
        %v730 = vxor.u32 %v509, 2147483648
        %v731 = vxor.u32 %v514, 2147483648
        %v732 = vxor.u32 %v517, 2147483648
        %v733 = vxor.u32 %v522, 2147483648
        %v734 = vxor.u32 %v525, 2147483648
        %v735 = vxor.u32 %v530, 2147483648
        %v736 = vxor.u32 %v533, 2147483648
        %v737 = vxor.u32 %v538, 2147483648
        %v738 = vxor.u32 %v541, 2147483648
        %v739 = vxor.u32 %v546, 2147483648
        %v740 = vxor.u32 %v549, 2147483648
        %v741 = vxor.u32 %v554, 2147483648
        %v742 = vxor.u32 %v557, 2147483648
        %v743 = vxor.u32 %v562, 2147483648
        %v744 = vxor.u32 %v565, 2147483648
        %v745 = vmul.f32 %v729, 1.442695
        %v746 = vpow.pop %v745
        %v747 = vmul.f32 %v730, 1.442695
        %v748 = vpow.pop %v747
        %v749 = vmul.f32 %v731, 1.442695
        %v750 = vpow.pop %v749
        %v751 = vmul.f32 %v732, 1.442695
        %v752 = vpow.pop %v751
        %v753 = vmul.f32 %v733, 1.442695
        %v754 = vpow.pop %v753
        %v755 = vmul.f32 %v734, 1.442695
        %v756 = vpow.pop %v755
        %v757 = vmul.f32 %v735, 1.442695
        %v758 = vpow.pop %v757
        %v759 = vmul.f32 %v736, 1.442695
        %v760 = vpow.pop %v759
        %v761 = vmul.f32 %v737, 1.442695
        %v762 = vpow.pop %v761
        %v763 = vmul.f32 %v738, 1.442695
        %v764 = vpow.pop %v763
        %v765 = vmul.f32 %v739, 1.442695
        %v766 = vpow.pop %v765
        %v767 = vmul.f32 %v740, 1.442695
        %v768 = vpow.pop %v767
        %v769 = vmul.f32 %v741, 1.442695
        %v770 = vpow.pop %v769
        %v771 = vmul.f32 %v742, 1.442695
        %v772 = vpow.pop %v771
        %v773 = vmul.f32 %v743, 1.442695
        %v774 = vpow.pop %v773
        %v775 = vmul.f32 %v744, 1.442695
        %v776 = vpow.pop %v775
        %v777 = vadd.f32 %v746, 1.0
        %v778 = vadd.f32 %v748, 1.0
        %v779 = vadd.f32 %v750, 1.0
        %v780 = vadd.f32 %v752, 1.0
        %v781 = vadd.f32 %v754, 1.0
        %v782 = vadd.f32 %v756, 1.0
        %v783 = vadd.f32 %v758, 1.0
        %v784 = vadd.f32 %v760, 1.0
        %v785 = vadd.f32 %v762, 1.0
        %v786 = vadd.f32 %v764, 1.0
        %v787 = vadd.f32 %v766, 1.0
        %v788 = vadd.f32 %v768, 1.0
        %v789 = vadd.f32 %v770, 1.0
        %v790 = vadd.f32 %v772, 1.0
        %v791 = vadd.f32 %v774, 1.0
        %v792 = vadd.f32 %v776, 1.0
        %v793 = vrcp.pop %v777
        %v794 = vmul.f32 1.0, %v793
        %v795 = vrcp.pop %v778
        %v796 = vmul.f32 1.0, %v795
        %v797 = vrcp.pop %v779
        %v798 = vmul.f32 1.0, %v797
        %v799 = vrcp.pop %v780
        %v800 = vmul.f32 1.0, %v799
        %v801 = vrcp.pop %v781
        %v802 = vmul.f32 1.0, %v801
        %v803 = vrcp.pop %v782
        %v804 = vmul.f32 1.0, %v803
        %v805 = vrcp.pop %v783
        %v806 = vmul.f32 1.0, %v805
        %v807 = vrcp.pop %v784
        %v808 = vmul.f32 1.0, %v807
        %v809 = vrcp.pop %v785
        %v810 = vmul.f32 1.0, %v809
        %v811 = vrcp.pop %v786
        %v812 = vmul.f32 1.0, %v811
        %v813 = vrcp.pop %v787
        %v814 = vmul.f32 1.0, %v813
        %v815 = vrcp.pop %v788
        %v816 = vmul.f32 1.0, %v815
        %v817 = vrcp.pop %v789
        %v818 = vmul.f32 1.0, %v817
        %v819 = vrcp.pop %v790
        %v820 = vmul.f32 1.0, %v819
        %v821 = vrcp.pop %v791
        %v822 = vmul.f32 1.0, %v821
        %v823 = vrcp.pop %v792
        %v824 = vmul.f32 1.0, %v823
        %v825 = vmul.f32 %v506, %v794
        %v826 = vmul.f32 %v509, %v796
        %v827 = vmul.f32 %v514, %v798
        %v828 = vmul.f32 %v517, %v800
        %v829 = vmul.f32 %v522, %v802
        %v830 = vmul.f32 %v525, %v804
        %v831 = vmul.f32 %v530, %v806
        %v832 = vmul.f32 %v533, %v808
        %v833 = vmul.f32 %v538, %v810
        %v834 = vmul.f32 %v541, %v812
        %v835 = vmul.f32 %v546, %v814
        %v836 = vmul.f32 %v549, %v816
        %v837 = vmul.f32 %v554, %v818
        %v838 = vmul.f32 %v557, %v820
        %v839 = vmul.f32 %v562, %v822
        %v840 = vmul.f32 %v565, %v824
        %v841 = vmul.f32 %v825, %v667
        %v842 = vmul.f32 %v826, %v670
        %v843 = vmul.f32 %v827, %v675
        %v844 = vmul.f32 %v828, %v678
        %v845 = vmul.f32 %v829, %v683
        %v846 = vmul.f32 %v830, %v686
        %v847 = vmul.f32 %v831, %v691
        %v848 = vmul.f32 %v832, %v694
        %v849 = vmul.f32 %v833, %v699
        %v850 = vmul.f32 %v834, %v702
        %v851 = vmul.f32 %v835, %v707
        %v852 = vmul.f32 %v836, %v710
        %v853 = vmul.f32 %v837, %v715
        %v854 = vmul.f32 %v838, %v718
        %v855 = vmul.f32 %v839, %v723
        %v856 = vmul.f32 %v840, %v726
        %v857 = vpack.c.bf16 %v842, %v841
        %v858 = vpack.c.bf16 %v844, %v843
        %v859 = vpack.c.bf16 %v846, %v845
        %v860 = vpack.c.bf16 %v848, %v847
        %v861 = vpack.c.bf16 %v850, %v849
        %v862 = vpack.c.bf16 %v852, %v851
        %v863 = vpack.c.bf16 %v854, %v853
        %v864 = vpack.c.bf16 %v856, %v855
        %v865 = vld [vmem:[#allocation2] sm:$0xff]
        %v866 = vld [vmem:[#allocation2 + $0x8] sm:$0xff]
        %v867 = vld [vmem:[#allocation2 + $0x10] sm:$0xff]
        %v868 = vld [vmem:[#allocation2 + $0x18] sm:$0xff]
        %v869 = vld [vmem:[#allocation2 + $0x20] sm:$0xff]
        %v870 = vld [vmem:[#allocation2 + $0x28] sm:$0xff]
        %v871 = vld [vmem:[#allocation2 + $0x30] sm:$0xff]
        %v872 = vld [vmem:[#allocation2 + $0x38] sm:$0xff]
        %v873 = vld [vmem:[#allocation2 + $0x40] sm:$0xff]
        %v874 = vld [vmem:[#allocation2 + $0x48] sm:$0xff]
        %v875 = vld [vmem:[#allocation2 + $0x50] sm:$0xff]
        %v876 = vld [vmem:[#allocation2 + $0x58] sm:$0xff]
        %v877 = vld [vmem:[#allocation2 + $0x60] sm:$0xff]
        %v878 = vld [vmem:[#allocation2 + $0x68] sm:$0xff]
        %v879 = vld [vmem:[#allocation2 + $0x70] sm:$0xff]
        %v880 = vld [vmem:[#allocation2 + $0x78] sm:$0xff]
        %v881 = vld [vmem:[%s289] sm:$0xf]
        %v882 = vld [vmem:[%s289 + $0x4] sm:$0xf]
        %v883 = vld [vmem:[%s289 + $0x8] sm:$0xf]
        %v884 = vld [vmem:[%s289 + $0xc] sm:$0xf]
        %v885 = vld [vmem:[%s289 + $0x10] sm:$0xf]
        %v886 = vld [vmem:[%s289 + $0x14] sm:$0xf]
        %v887 = vld [vmem:[%s289 + $0x18] sm:$0xf]
        %v888 = vld [vmem:[%s289 + $0x1c] sm:$0xf]
        %v889 = vld [vmem:[%s289 + $0x20] sm:$0xf]
        %v890 = vld [vmem:[%s289 + $0x24] sm:$0xf]
        %v891 = vld [vmem:[%s289 + $0x28] sm:$0xf]
        %v892 = vld [vmem:[%s289 + $0x2c] sm:$0xf]
        %v893 = vld [vmem:[%s289 + $0x30] sm:$0xf]
        %v894 = vld [vmem:[%s289 + $0x34] sm:$0xf]
        %v895 = vld [vmem:[%s289 + $0x38] sm:$0xf]
        %v896 = vld [vmem:[%s289 + $0x3c] sm:$0xf]
        %v913 = vunpack.c.l.b16 %v881
        %v914 = vunpack.c.l.b16 %v882
        %v915 = vunpack.c.l.b16 %v883
        %v916 = vunpack.c.l.b16 %v884
        %v917 = vunpack.c.l.b16 %v885
        %v918 = vunpack.c.l.b16 %v886
        %v919 = vunpack.c.l.b16 %v887
        %v920 = vunpack.c.l.b16 %v888
        %v921 = vunpack.c.l.b16 %v889
        %v922 = vunpack.c.l.b16 %v890
        %v923 = vunpack.c.l.b16 %v891
        %v924 = vunpack.c.l.b16 %v892
        %v925 = vunpack.c.l.b16 %v893
        %v926 = vunpack.c.l.b16 %v894
        %v927 = vunpack.c.l.b16 %v895
        %v928 = vunpack.c.l.b16 %v896
        %v929 = vpack.c.b16 %v914, %v913
        %v930 = vpack.c.b16 %v916, %v915
        %v931 = vpack.c.b16 %v918, %v917
        %v932 = vpack.c.b16 %v920, %v919
        %v933 = vpack.c.b16 %v922, %v921
        %v934 = vpack.c.b16 %v924, %v923
        %v935 = vpack.c.b16 %v926, %v925
        %v936 = vpack.c.b16 %v928, %v927
        %945 = vmatprep.subr.bf16.mxu0 0
        %946 = vmatpush1.bf16.msra.mxu0 %v936
        %947 = vmatprep.subr.bf16.mxu0 0
        %948 = vmatpush1.bf16.msra.mxu0 %v935
        %949 = vmatprep.subr.bf16.mxu0 0
        %950 = vmatpush1.bf16.msra.mxu0 %v934
        %951 = vmatprep.subr.bf16.mxu0 0
        %952 = vmatpush1.bf16.msra.mxu0 %v933
        %953 = vmatprep.subr.bf16.mxu0 0
        %954 = vmatpush1.bf16.msra.mxu0 %v932
        %955 = vmatprep.subr.bf16.mxu0 0
        %956 = vmatpush1.bf16.msra.mxu0 %v931
        %957 = vmatprep.subr.bf16.mxu0 0
        %958 = vmatpush1.bf16.msra.mxu0 %v930
        %959 = vmatprep.subr.bf16.mxu0 0
        %960 = vmatpush1.bf16.msra.mxu0 %v929
        %961 = vmatprep.subr.bf16.mxu0 0
        %962 = vmatpush2.bf16.msra.mxu0 0
        %963 = vmatprep.subr.bf16.mxu0 0
        %964 = vmatpush2.bf16.msra.mxu0 0
        %965 = vmatprep.subr.bf16.mxu0 0
        %966 = vmatpush2.bf16.msra.mxu0 0
        %967 = vmatprep.subr.bf16.mxu0 0
        %968 = vmatpush2.bf16.msra.mxu0 0
        %969 = vmatprep.subr.bf16.mxu0 0
        %970 = vmatpush2.bf16.msra.mxu0 0
        %971 = vmatprep.subr.bf16.mxu0 0
        %972 = vmatpush2.bf16.msra.mxu0 0
        %973 = vmatprep.subr.bf16.mxu0 0
        %974 = vmatpush2.bf16.msra.mxu0 0
        %975 = vmatprep.subr.bf16.mxu0 0
        %976 = vmatpush2.bf16.msra.mxu0 0
        %977 = vmatprep.mubr.bf16.mxu0 0
        %978 = vmatmul.mubr.bf16.gmra.mxu0 %v857
        %v979 = vpop.f32.mrf.mxu0
        %v980 = vadd.f32 0.0, %v979
        %v981 = vpop.f32.mrf.mxu0
        %v982 = vpop.f32.mrf.mxu0
        %v983 = vadd.f32 0.0, %v982
        %v984 = vpop.f32.mrf.mxu0
        %985 = vmatprep.mubr.bf16.mxu0 0
        %986 = vmatmul.mubr.bf16.gmra.mxu0 %v858
        %v987 = vpop.f32.mrf.mxu0
        %v988 = vadd.f32 0.0, %v987
        %v989 = vpop.f32.mrf.mxu0
        %v990 = vpop.f32.mrf.mxu0
        %v991 = vadd.f32 0.0, %v990
        %v992 = vpop.f32.mrf.mxu0
        %993 = vmatprep.mubr.bf16.mxu0 0
        %994 = vmatmul.mubr.bf16.gmra.mxu0 %v859
        %v995 = vpop.f32.mrf.mxu0
        %v996 = vadd.f32 0.0, %v995
        %v997 = vpop.f32.mrf.mxu0
        %v998 = vpop.f32.mrf.mxu0
        %v999 = vadd.f32 0.0, %v998
        %v1000 = vpop.f32.mrf.mxu0
        %1001 = vmatprep.mubr.bf16.mxu0 0
        %1002 = vmatmul.mubr.bf16.gmra.mxu0 %v860
        %v1003 = vpop.f32.mrf.mxu0
        %v1004 = vadd.f32 0.0, %v1003
        %v1005 = vpop.f32.mrf.mxu0
        %v1006 = vpop.f32.mrf.mxu0
        %v1007 = vadd.f32 0.0, %v1006
        %v1008 = vpop.f32.mrf.mxu0
        %1009 = vmatprep.mubr.bf16.mxu0 0
        %1010 = vmatmul.mubr.bf16.gmra.mxu0 %v861
        %v1011 = vpop.f32.mrf.mxu0
        %v1012 = vadd.f32 0.0, %v1011
        %v1013 = vpop.f32.mrf.mxu0
        %v1014 = vpop.f32.mrf.mxu0
        %v1015 = vadd.f32 0.0, %v1014
        %v1016 = vpop.f32.mrf.mxu0
        %1017 = vmatprep.mubr.bf16.mxu0 0
        %1018 = vmatmul.mubr.bf16.gmra.mxu0 %v862
        %v1019 = vpop.f32.mrf.mxu0
        %v1020 = vadd.f32 0.0, %v1019
        %v1021 = vpop.f32.mrf.mxu0
        %v1022 = vpop.f32.mrf.mxu0
        %v1023 = vadd.f32 0.0, %v1022
        %v1024 = vpop.f32.mrf.mxu0
        %1025 = vmatprep.mubr.bf16.mxu0 0
        %1026 = vmatmul.mubr.bf16.gmra.mxu0 %v863
        %v1027 = vpop.f32.mrf.mxu0
        %v1028 = vadd.f32 0.0, %v1027
        %v1029 = vpop.f32.mrf.mxu0
        %v1030 = vpop.f32.mrf.mxu0
        %v1031 = vadd.f32 0.0, %v1030
        %v1032 = vpop.f32.mrf.mxu0
        %1033 = vmatprep.mubr.bf16.mxu0 0
        %1034 = vmatmul.mubr.bf16.gmra.mxu0 %v864
        %v1035 = vpop.f32.mrf.mxu0
        %v1036 = vadd.f32 0.0, %v1035
        %v1037 = vpop.f32.mrf.mxu0
        %v1038 = vpop.f32.mrf.mxu0
        %v1039 = vadd.f32 0.0, %v1038
        %v1040 = vpop.f32.mrf.mxu0
        %1041 = vdwg.mxu0
        %v1042 = vadd.f32 %v865, %v980
        %v1043 = vadd.f32 %v866, %v983
        %v1044 = vadd.f32 %v867, %v988
        %v1045 = vadd.f32 %v868, %v991
        %v1046 = vadd.f32 %v869, %v996
        %v1047 = vadd.f32 %v870, %v999
        %v1048 = vadd.f32 %v871, %v1004
        %v1049 = vadd.f32 %v872, %v1007
        %v1050 = vadd.f32 %v873, %v1012
        %v1051 = vadd.f32 %v874, %v1015
        %v1052 = vadd.f32 %v875, %v1020
        %v1053 = vadd.f32 %v876, %v1023
        %v1054 = vadd.f32 %v877, %v1028
        %v1055 = vadd.f32 %v878, %v1031
        %v1056 = vadd.f32 %v879, %v1036
        %v1057 = vadd.f32 %v880, %v1039
        %1058 = vst [vmem:[#allocation2] sm:$0xff] %v1042
        %1059 = vst [vmem:[#allocation2 + $0x8] sm:$0xff] %v1043
        %1060 = vst [vmem:[#allocation2 + $0x10] sm:$0xff] %v1044
        %1061 = vst [vmem:[#allocation2 + $0x18] sm:$0xff] %v1045
        %1062 = vst [vmem:[#allocation2 + $0x20] sm:$0xff] %v1046
        %1063 = vst [vmem:[#allocation2 + $0x28] sm:$0xff] %v1047
        %1064 = vst [vmem:[#allocation2 + $0x30] sm:$0xff] %v1048
        %1065 = vst [vmem:[#allocation2 + $0x38] sm:$0xff] %v1049
        %1066 = vst [vmem:[#allocation2 + $0x40] sm:$0xff] %v1050
        %1067 = vst [vmem:[#allocation2 + $0x48] sm:$0xff] %v1051
        %1068 = vst [vmem:[#allocation2 + $0x50] sm:$0xff] %v1052
        %1069 = vst [vmem:[#allocation2 + $0x58] sm:$0xff] %v1053
        %1070 = vst [vmem:[#allocation2 + $0x60] sm:$0xff] %v1054
        %1071 = vst [vmem:[#allocation2 + $0x68] sm:$0xff] %v1055
        %1072 = vst [vmem:[#allocation2 + $0x70] sm:$0xff] %v1056
        %1073 = vst [vmem:[#allocation2 + $0x78] sm:$0xff] %v1057
        %p1074 = scmp.eq.s32.totalorder %s28, 2
        // Predicated region
        $region57: #{tpu_custom_call.1} parent=35 // pred_check
          %p1075 = pneg %p1074
        $region58: #{tpu_custom_call.1} parent=35 // pred_check_branch
          %1077 = sbr.rel (%p1075) target = $region60
        $region59: #{tpu_custom_call.1} parent=35 // pred_region
          %v1078 = vld [vmem:[#allocation2] sm:$0xff]
          %v1079 = vld [vmem:[#allocation2 + $0x8] sm:$0xff]
          %v1080 = vld [vmem:[#allocation2 + $0x10] sm:$0xff]
          %v1081 = vld [vmem:[#allocation2 + $0x18] sm:$0xff]
          %v1082 = vld [vmem:[#allocation2 + $0x20] sm:$0xff]
          %v1083 = vld [vmem:[#allocation2 + $0x28] sm:$0xff]
          %v1084 = vld [vmem:[#allocation2 + $0x30] sm:$0xff]
          %v1085 = vld [vmem:[#allocation2 + $0x38] sm:$0xff]
          %v1086 = vld [vmem:[#allocation2 + $0x40] sm:$0xff]
          %v1087 = vld [vmem:[#allocation2 + $0x48] sm:$0xff]
          %v1088 = vld [vmem:[#allocation2 + $0x50] sm:$0xff]
          %v1089 = vld [vmem:[#allocation2 + $0x58] sm:$0xff]
          %v1090 = vld [vmem:[#allocation2 + $0x60] sm:$0xff]
          %v1091 = vld [vmem:[#allocation2 + $0x68] sm:$0xff]
          %v1092 = vld [vmem:[#allocation2 + $0x70] sm:$0xff]
          %v1093 = vld [vmem:[#allocation2 + $0x78] sm:$0xff]
          %1094 = vst [vmem:[#allocation11] sm:$0xff] %v1078
          %1095 = vst [vmem:[#allocation11 + $0x8] sm:$0xff] %v1079
          %1096 = vst [vmem:[#allocation11 + $0x10] sm:$0xff] %v1080
          %1097 = vst [vmem:[#allocation11 + $0x18] sm:$0xff] %v1081
          %1098 = vst [vmem:[#allocation11 + $0x20] sm:$0xff] %v1082
          %1099 = vst [vmem:[#allocation11 + $0x28] sm:$0xff] %v1083
          %1100 = vst [vmem:[#allocation11 + $0x30] sm:$0xff] %v1084
          %1101 = vst [vmem:[#allocation11 + $0x38] sm:$0xff] %v1085
          %1102 = vst [vmem:[#allocation11 + $0x40] sm:$0xff] %v1086
          %1103 = vst [vmem:[#allocation11 + $0x48] sm:$0xff] %v1087
          %1104 = vst [vmem:[#allocation11 + $0x50] sm:$0xff] %v1088
          %1105 = vst [vmem:[#allocation11 + $0x58] sm:$0xff] %v1089
          %1106 = vst [vmem:[#allocation11 + $0x60] sm:$0xff] %v1090
          %1107 = vst [vmem:[#allocation11 + $0x68] sm:$0xff] %v1091
          %1108 = vst [vmem:[#allocation11 + $0x70] sm:$0xff] %v1092
          %1109 = vst [vmem:[#allocation11 + $0x78] sm:$0xff] %v1093
        $region60: #{tpu_custom_call.1} parent=35 // pred_fallthru
          _
        // Predicated region
        $region61: #{tpu_custom_call.1} parent=35 // pred_check
          %p1110 = pneg %p157
        $region62: #{tpu_custom_call.1} parent=35 // pred_check_branch
          %1112 = sbr.rel (%p1110) target = $region64
        $region63: #{tpu_custom_call.1} parent=35 // pred_region
          %s1113 = smul.u32 16, %s27
          %s1115 = ssub.s32 2048, 2048
          %1116 = vsyncadd [#allocation5], %s1115
          %s1117 = smul.addr %s1113, 128
          %s1118 = scalar_lea.hbm %s4, %s1117
          %s1119 = sshll.u32 [#allocation11], 4
          %s1120 = int_to_ptr.vmem [resolvable:$true] %s1119
          %1125 = dma.vmem_to_hbm [thread:$0]  %s1120, 2048, %s1118, [#allocation5], 128, 128, 8
        $region64: #{tpu_custom_call.1} parent=35 // pred_fallthru
          _
        // Predicated region
        $region65: #{tpu_custom_call.1} parent=35 // pred_check
          %p1126 = pneg %p157
        $region66: #{tpu_custom_call.1} parent=35 // pred_check_branch
          %1128 = sbr.rel (%p1126) target = $region68
        $region67: #{tpu_custom_call.1} parent=35 // pred_region
          %1129 = dma.done [#allocation5], 2048
        $region68: #{tpu_custom_call.1} parent=35 // pred_fallthru
          _
      $region36: #{tpu_custom_call.1} parent=5 // pred_fallthru
        _
      %p1130 = scmp.le.s32.totalorder 2, %s18
      // Predicated region
      $region69: #{tpu_custom_call.1} parent=5 // pred_check
        %p1131 = pneg %p1130
      $region70: #{tpu_custom_call.1} parent=5 // pred_check_branch
        %1133 = sbr.rel (%p1131) target = $region72
      $region71: #{tpu_custom_call.1} parent=5 // pred_region
        %s1134 = ssub.s32 %s18, 2
      $region72: #{tpu_custom_call.1} parent=5 // pred_fallthru
        _
    $region6: #{tpu_custom_call.1} parent=1 // loop_footer
      %s22 = sadd.s32 1, %s18
    $region7: #{tpu_custom_call.1} parent=1 // loop_footer_branch
      %17 = sbr.rel target = $region3
    $region8: #{tpu_custom_call.1} parent=1 // loop_exit
      _
    %1135 = vsyncpa [#allocation4], 1
    %s1136 = scalar_lea.sflag [#allocation4], 1
    %1137 = vsyncpa %s1136, 1
    %1138 = vsyncpa [#allocation7], 1
    %s1139 = scalar_lea.sflag [#allocation7], 1
    %1140 = vsyncpa %s1139, 1
    %1141 = vsyncpa [#allocation10], 1
    %s1142 = scalar_lea.sflag [#allocation10], 1
    %1143 = vsyncpa %s1142, 1
    %1144 = vsyncpa [#allocation5], 1
    %s1145 = scalar_lea.sflag [#allocation5], 1
    %1146 = vsyncpa %s1145, 1

</llo_original>
